<compile_context>
chip_gen: v7x
topology: tpu7x:2x2x1
jax: 0.10.0
libtpu: 0.0.40
codegen_flags: <defaults>
</compile_context>

<pallas_src>
import functools

import jax
import jax.numpy as jnp
from jax.experimental import pallas as pl
from jax.experimental.pallas import tpu as pltpu


LEAKY_SLOPE = 0.01  # PyTorch nn.LeakyReLU default negative_slope


def _round_up(n: int, m: int) -> int:
    return ((n + m - 1) // m) * m


def _make_mlp_kernel(num_layers: int):
    """Fused MLP kernel.

    Ref order: (x, w0, b0, w1, b1, ..., out, acc_scratch).
    Layer 0 is K-tiled: partial products are accumulated into `acc_scratch`
    across pl.program_id(1); on the last K step the bias, LeakyReLU and all
    remaining (VMEM-resident) layers are applied and the output tile stored.
    """

    def kernel(*refs):
        x_ref = refs[0]
        out_ref = refs[-2]
        acc_ref = refs[-1]
        params = refs[1:-2]
        assert len(params) == 2 * num_layers

        k_step = pl.program_id(1)
        num_k = pl.num_programs(1)

        @pl.when(k_step == 0)
        def _init():
            acc_ref[...] = jnp.zeros_like(acc_ref)

        # Layer 0 partial matmul: (TM, TK) x (TK, H) in bf16, f32 accumulate.
        acc_ref[...] += jnp.dot(
            x_ref[...], params[0][...], preferred_element_type=jnp.float32
        )

        @pl.when(k_step == num_k - 1)
        def _finalize():
            h = acc_ref[...] + params[1][...]  # f32 bias, broadcast over rows
            for j in range(1, num_layers):
                # LeakyReLU after every layer except the last.
                h = jnp.where(h >= 0, h, LEAKY_SLOPE * h)
                w = params[2 * j][...]
                b = params[2 * j + 1][...]
                h = jnp.dot(
                    h.astype(w.dtype), w, preferred_element_type=jnp.float32
                ) + b
            out_ref[...] = h.astype(out_ref.dtype)

    return kernel


@functools.partial(jax.jit, static_argnames=("compute_dtype", "tk"))
def eeg_to_latent_mlp(x, weights, biases, *, compute_dtype=jnp.bfloat16, tk=512):
    """Run the fused MLP Pallas kernel.

    Args:
      x: (batch, num_channels, sequence_length) float32
      weights: list of (in_features, out_features) arrays (PyTorch W already
               transposed), layer 0 first.
      biases: list of (out_features,) arrays.
      compute_dtype: matmul input dtype (bf16 halves weight HBM traffic;
                     accumulation stays f32).
      tk: reduction tile for the first layer (multiple of 128).
    Returns:
      (batch, latent_dim) float32
    """
    batch = x.shape[0]
    k_in = x.shape[1] * x.shape[2]
    x_flat = x.reshape(batch, k_in)

    num_layers = len(weights)
    latent_dim = weights[-1].shape[1]

    # ---- tile sizes -------------------------------------------------------
    # M tile: 128 for real batches (MXU-sized), otherwise batch rounded up to
    # the f32 sublane count (8) so tiny batches don't pad to 128.
    tm = 128 if batch >= 128 else _round_up(max(batch, 1), 8)
    tk = min(tk, _round_up(k_in, 128))

    b_pad = _round_up(batch, tm)
    k_pad = _round_up(k_in, tk)

    out_dims = [w.shape[1] for w in weights]
    out_dims_pad = [_round_up(d, 128) for d in out_dims]  # lane-dense layers
    in_dims_pad = [k_pad] + out_dims_pad[:-1]
    h_pad0 = out_dims_pad[0]
    n_pad = out_dims_pad[-1]

    # ---- pad + cast operands (zero padding is exact for this MLP) ---------
    x_p = jnp.zeros((b_pad, k_pad), compute_dtype)
    x_p = x_p.at[:batch, :k_in].set(x_flat.astype(compute_dtype))

    operands = [x_p]
    for i, (w, b) in enumerate(zip(weights, biases)):
        w_p = jnp.zeros((in_dims_pad[i], out_dims_pad[i]), compute_dtype)
        w_p = w_p.at[: w.shape[0], : w.shape[1]].set(w.astype(compute_dtype))
        b_p = jnp.zeros((1, out_dims_pad[i]), jnp.float32)
        b_p = b_p.at[0, : b.shape[0]].set(b.astype(jnp.float32))
        operands += [w_p, b_p]

    grid_m = b_pad // tm
    grid_k = k_pad // tk

    # ---- block specs -------------------------------------------------------
    in_specs = [
        # x tile varies over both grid axes.
        pl.BlockSpec((tm, tk), lambda i, k: (i, k)),
        # W0 streamed along K.
        pl.BlockSpec((tk, h_pad0), lambda i, k: (k, 0)),
        # b0 resident.
        pl.BlockSpec((1, h_pad0), lambda i, k: (0, 0)),
    ]
    for j in range(1, num_layers):
        # Hidden / output weights + biases: constant index -> fetched once,
        # VMEM-resident across the whole grid.
        in_specs.append(
            pl.BlockSpec((in_dims_pad[j], out_dims_pad[j]), lambda i, k: (0, 0))
        )
        in_specs.append(pl.BlockSpec((1, out_dims_pad[j]), lambda i, k: (0, 0)))

    out_spec = pl.BlockSpec((tm, n_pad), lambda i, k: (i, 0))

    kernel = _make_mlp_kernel(num_layers)

    out_p = pl.pallas_call(
        kernel,
        out_shape=jax.ShapeDtypeStruct((b_pad, n_pad), jnp.float32),
        grid_spec=pltpu.PrefetchScalarGridSpec(
            num_scalar_prefetch=0,
            grid=(grid_m, grid_k),
            in_specs=in_specs,
            out_specs=out_spec,
            scratch_shapes=[pltpu.VMEM((tm, h_pad0), jnp.float32)],
        ),
        compiler_params=pltpu.CompilerParams(
            dimension_semantics=("parallel", "arbitrary")
        ),
    )(*operands)

    return out_p[:batch, :latent_dim]


def init_params(key, num_channels, sequence_length, latent_dim, hidden_dim,
                num_hidden_layers):
    """Parameters with PyTorch-Linear-style init; weights stored as (in, out)."""
    input_size = num_channels * sequence_length
    dims = [input_size]
    if num_hidden_layers > 0:
        dims += [hidden_dim] * num_hidden_layers
    dims += [latent_dim]

    weights, biases = [], []
    for i in range(len(dims) - 1):
        fan_in, fan_out = dims[i], dims[i + 1]
        key, kw, kb = jax.random.split(key, 3)
        bound = 1.0 / (fan_in ** 0.5)
        w = jax.random.uniform(kw, (fan_in, fan_out), jnp.float32,
                               minval=-bound, maxval=bound)
        b = jax.random.uniform(kb, (fan_out,), jnp.float32,
                               minval=-bound, maxval=bound)
        weights.append(w)
        biases.append(b)
    return weights, biases


def reference_forward(x, weights, biases, compute_dtype=jnp.float32):
    """Pure-JAX reference mirroring the PyTorch forward (same matmul dtype as
    the kernel when compute_dtype=bfloat16; accumulation in f32)."""
    h = x.reshape(x.shape[0], -1)
    n = len(weights)
    for i, (w, b) in enumerate(zip(weights, biases)):
        h = jnp.dot(h.astype(compute_dtype), w.astype(compute_dtype),
                    preferred_element_type=jnp.float32) + b.astype(jnp.float32)
        if i < n - 1:
            h = jnp.where(h >= 0, h, LEAKY_SLOPE * h)
    return h


if __name__ == "__main__":
    # Small-but-representative shapes (spec defaults for C, L; reduced dims).
    # Chosen so the kernel exercises: K tiling (1360 -> 1536 = 3 x 512),
    # batch padding (5 -> 8), and lane padding of hidden (96 -> 128) and
    # latent (200 -> 256) dims.
    batch = 5
    num_channels = 17
    sequence_length = 80
    latent_dim = 200
    hidden_dim = 96
    num_hidden_layers = 2

    key = jax.random.PRNGKey(0)
    key, kx = jax.random.split(key)
    x = jax.random.normal(kx, (batch, num_channels, sequence_length),
                          dtype=jnp.float32)

    weights, biases = init_params(key, num_channels, sequence_length,
                                  latent_dim, hidden_dim, num_hidden_layers)

    out = eeg_to_latent_mlp(x, tuple(weights), tuple(biases))
    out = jax.block_until_ready(out)

    # Reference with matching matmul precision (bf16 inputs, f32 accumulate).
    ref = reference_forward(x, weights, biases, compute_dtype=jnp.bfloat16)

    assert out.shape == (batch, latent_dim), out.shape
    assert jnp.allclose(out, ref, atol=1e-2, rtol=1e-2), (
        "Pallas output mismatch vs reference: max abs err = "
        f"{float(jnp.max(jnp.abs(out - ref)))}")

    print("KERNEL_OK")
</pallas_src>

<mosaic_0001>
module attributes {stable_mosaic.version = 11 : i64} {
  func.func @kernel(%arg0: i32, %arg1: i32, %arg2: memref<8x512xbf16, #tpu.memory_space<vmem>>, %arg3: memref<512x128xbf16, #tpu.memory_space<vmem>>, %arg4: memref<1x128xf32, #tpu.memory_space<vmem>>, %arg5: memref<128x128xbf16, #tpu.memory_space<vmem>>, %arg6: memref<1x128xf32, #tpu.memory_space<vmem>>, %arg7: memref<128x256xbf16, #tpu.memory_space<vmem>>, %arg8: memref<1x256xf32, #tpu.memory_space<vmem>>, %arg9: memref<8x256xf32, #tpu.memory_space<vmem>>, %arg10: memref<8x128xf32, #tpu.memory_space<vmem>>) attributes {dimension_semantics = [#tpu.dimension_semantics<parallel>, #tpu.dimension_semantics<arbitrary>], iteration_bounds = array<i64: 1, 3>, scalar_prefetch = 0 : i64, scratch_operands = 1 : i64, tpu.core_type = #tpu.core_type<tc>, window_params = [{transform_indices = @transform_0, window_bounds = array<i64: 8, 512>}, {transform_indices = @transform_1, window_bounds = array<i64: 512, 128>}, {pipeline_mode = #tpu.pipeline_mode<synchronous>, transform_indices = @transform_2, window_bounds = array<i64: 1, 128>}, {pipeline_mode = #tpu.pipeline_mode<synchronous>, transform_indices = @transform_3, window_bounds = array<i64: 128, 128>}, {pipeline_mode = #tpu.pipeline_mode<synchronous>, transform_indices = @transform_4, window_bounds = array<i64: 1, 128>}, {pipeline_mode = #tpu.pipeline_mode<synchronous>, transform_indices = @transform_5, window_bounds = array<i64: 128, 256>}, {pipeline_mode = #tpu.pipeline_mode<synchronous>, transform_indices = @transform_6, window_bounds = array<i64: 1, 256>}, {transform_indices = @transform_7, window_bounds = array<i64: 8, 256>}]} {
    %c0_i32 = arith.constant 0 : i32
    %0 = arith.cmpi eq, %arg1, %c0_i32 : i32
    %1 = arith.extui %0 : i1 to i32
    %c0_i32_0 = arith.constant 0 : i32
    %2 = arith.cmpi ne, %1, %c0_i32_0 : i32
    scf.if %2 {
      %cst_9 = arith.constant 0.000000e+00 : f32
      %12 = vector.broadcast %cst_9 : f32 to vector<8x128xf32>
      %c0_10 = arith.constant 0 : index
      %c0_11 = arith.constant 0 : index
      %13 = vector.load %arg10[%c0_10, %c0_11] : memref<8x128xf32, #tpu.memory_space<vmem>>, vector<8x128xf32>
      tpu.vector_store %arg10[%c0_10, %c0_11], %12 {strides = array<i32>} : memref<8x128xf32, #tpu.memory_space<vmem>>, vector<8x128xf32>,
    } else {
    }
    %c0 = arith.constant 0 : index
    %c0_1 = arith.constant 0 : index
    %3 = vector.load %arg10[%c0, %c0_1] : memref<8x128xf32, #tpu.memory_space<vmem>>, vector<8x128xf32>
    %c0_2 = arith.constant 0 : index
    %c0_3 = arith.constant 0 : index
    %4 = vector.load %arg2[%c0_2, %c0_3] : memref<8x512xbf16, #tpu.memory_space<vmem>>, vector<8x512xbf16>
    %c0_4 = arith.constant 0 : index
    %c0_5 = arith.constant 0 : index
    %5 = vector.load %arg3[%c0_4, %c0_5] : memref<512x128xbf16, #tpu.memory_space<vmem>>, vector<512x128xbf16>
    %cst = arith.constant dense<0.000000e+00> : vector<8x128xf32>
    %6 = tpu.matmul %4, %5, %cst {dimension_numbers = #tpu.dot_dimension_numbers<[1], [0], [0], [1], [0, 0, 1, 1], [], []>} : vector<8x512xbf16>, vector<512x128xbf16>, vector<8x128xf32> -> vector<8x128xf32>
    %7 = arith.addf %3, %6 : vector<8x128xf32>
    %c0_6 = arith.constant 0 : index
    %c0_7 = arith.constant 0 : index
    %8 = vector.load %arg10[%c0_6, %c0_7] : memref<8x128xf32, #tpu.memory_space<vmem>>, vector<8x128xf32>
    tpu.vector_store %arg10[%c0_6, %c0_7], %7 {strides = array<i32>} : memref<8x128xf32, #tpu.memory_space<vmem>>, vector<8x128xf32>,
    %c2_i32 = arith.constant 2 : i32
    %9 = arith.cmpi eq, %arg1, %c2_i32 : i32
    %10 = arith.extui %9 : i1 to i32
    %c0_i32_8 = arith.constant 0 : i32
    %11 = arith.cmpi ne, %10, %c0_i32_8 : i32
    scf.if %11 {
      %c0_9 = arith.constant 0 : index
      %c0_10 = arith.constant 0 : index
      %12 = vector.load %arg10[%c0_9, %c0_10] : memref<8x128xf32, #tpu.memory_space<vmem>>, vector<8x128xf32>
      %c0_11 = arith.constant 0 : index
      %c0_12 = arith.constant 0 : index
      %13 = vector.load %arg4[%c0_11, %c0_12] : memref<1x128xf32, #tpu.memory_space<vmem>>, vector<1x128xf32>
      %14 = vector.broadcast %13 : vector<1x128xf32> to vector<8x128xf32>
      %15 = arith.addf %12, %14 : vector<8x128xf32>
      %cst_13 = arith.constant 0.000000e+00 : f32
      %16 = vector.broadcast %cst_13 : f32 to vector<8x128xf32>
      %17 = arith.cmpf oge, %15, %16 : vector<8x128xf32>
      %cst_14 = arith.constant 0.00999999977 : f32
      %18 = vector.broadcast %cst_14 : f32 to vector<8x128xf32>
      %19 = arith.mulf %18, %15 : vector<8x128xf32>
      %20 = arith.select %17, %15, %19 : vector<8x128xi1>, vector<8x128xf32>
      %c0_15 = arith.constant 0 : index
      %c0_16 = arith.constant 0 : index
      %21 = vector.load %arg5[%c0_15, %c0_16] : memref<128x128xbf16, #tpu.memory_space<vmem>>, vector<128x128xbf16>
      %c0_17 = arith.constant 0 : index
      %c0_18 = arith.constant 0 : index
      %22 = vector.load %arg6[%c0_17, %c0_18] : memref<1x128xf32, #tpu.memory_space<vmem>>, vector<1x128xf32>
      %23 = arith.truncf %20 : vector<8x128xf32> to vector<8x128xbf16>
      %cst_19 = arith.constant dense<0.000000e+00> : vector<8x128xf32>
      %24 = tpu.matmul %23, %21, %cst_19 {dimension_numbers = #tpu.dot_dimension_numbers<[1], [0], [0], [1], [0, 0, 1, 1], [], []>} : vector<8x128xbf16>, vector<128x128xbf16>, vector<8x128xf32> -> vector<8x128xf32>
      %25 = vector.broadcast %22 : vector<1x128xf32> to vector<8x128xf32>
      %26 = arith.addf %24, %25 : vector<8x128xf32>
      %cst_20 = arith.constant 0.000000e+00 : f32
      %27 = vector.broadcast %cst_20 : f32 to vector<8x128xf32>
      %28 = arith.cmpf oge, %26, %27 : vector<8x128xf32>
      %cst_21 = arith.constant 0.00999999977 : f32
      %29 = vector.broadcast %cst_21 : f32 to vector<8x128xf32>
      %30 = arith.mulf %29, %26 : vector<8x128xf32>
      %31 = arith.select %28, %26, %30 : vector<8x128xi1>, vector<8x128xf32>
      %c0_22 = arith.constant 0 : index
      %c0_23 = arith.constant 0 : index
      %32 = vector.load %arg7[%c0_22, %c0_23] : memref<128x256xbf16, #tpu.memory_space<vmem>>, vector<128x256xbf16>
      %c0_24 = arith.constant 0 : index
      %c0_25 = arith.constant 0 : index
      %33 = vector.load %arg8[%c0_24, %c0_25] : memref<1x256xf32, #tpu.memory_space<vmem>>, vector<1x256xf32>
      %34 = arith.truncf %31 : vector<8x128xf32> to vector<8x128xbf16>
      %cst_26 = arith.constant dense<0.000000e+00> : vector<8x256xf32>
      %35 = tpu.matmul %34, %32, %cst_26 {dimension_numbers = #tpu.dot_dimension_numbers<[1], [0], [0], [1], [0, 0, 1, 1], [], []>} : vector<8x128xbf16>, vector<128x256xbf16>, vector<8x256xf32> -> vector<8x256xf32>
      %36 = vector.broadcast %33 : vector<1x256xf32> to vector<8x256xf32>
      %37 = arith.addf %35, %36 : vector<8x256xf32>
      %c0_27 = arith.constant 0 : index
      %c0_28 = arith.constant 0 : index
      %38 = vector.load %arg9[%c0_27, %c0_28] : memref<8x256xf32, #tpu.memory_space<vmem>>, vector<8x256xf32>
      tpu.vector_store %arg9[%c0_27, %c0_28], %37 {strides = array<i32>} : memref<8x256xf32, #tpu.memory_space<vmem>>, vector<8x256xf32>,
    } else {
    }
    return
  }
  func.func @transform_0(%arg0: i32, %arg1: i32) -> (i32, i32) {
    %c0_i32 = arith.constant 0 : i32
    return %arg0, %arg1 : i32, i32
  }
  func.func @transform_1(%arg0: i32, %arg1: i32) -> (i32, i32) {
    %c0_i32 = arith.constant 0 : i32
    %c0_i32_0 = arith.constant 0 : i32
    return %arg1, %c0_i32 : i32, i32
  }
  func.func @transform_2(%arg0: i32, %arg1: i32) -> (i32, i32) {
    %c0_i32 = arith.constant 0 : i32
    %c0_i32_0 = arith.constant 0 : i32
    %c0_i32_1 = arith.constant 0 : i32
    return %c0_i32, %c0_i32_0 : i32, i32
  }
  func.func @transform_3(%arg0: i32, %arg1: i32) -> (i32, i32) {
    %c0_i32 = arith.constant 0 : i32
    %c0_i32_0 = arith.constant 0 : i32
    %c0_i32_1 = arith.constant 0 : i32
    return %c0_i32, %c0_i32_0 : i32, i32
  }
  func.func @transform_4(%arg0: i32, %arg1: i32) -> (i32, i32) {
    %c0_i32 = arith.constant 0 : i32
    %c0_i32_0 = arith.constant 0 : i32
    %c0_i32_1 = arith.constant 0 : i32
    return %c0_i32, %c0_i32_0 : i32, i32
  }
  func.func @transform_5(%arg0: i32, %arg1: i32) -> (i32, i32) {
    %c0_i32 = arith.constant 0 : i32
    %c0_i32_0 = arith.constant 0 : i32
    %c0_i32_1 = arith.constant 0 : i32
    return %c0_i32, %c0_i32_0 : i32, i32
  }
  func.func @transform_6(%arg0: i32, %arg1: i32) -> (i32, i32) {
    %c0_i32 = arith.constant 0 : i32
    %c0_i32_0 = arith.constant 0 : i32
    %c0_i32_1 = arith.constant 0 : i32
    return %c0_i32, %c0_i32_0 : i32, i32
  }
  func.func @transform_7(%arg0: i32, %arg1: i32) -> (i32, i32) {
    %c0_i32 = arith.constant 0 : i32
    %c0_i32_0 = arith.constant 0 : i32
    return %arg0, %c0_i32 : i32, i32
  }
}

</mosaic_0001>

<llo_original>
// kernel: eeg_to_latent_mlp.1
$region0: #{eeg_to_latent_mlp.1}
  #allocation0 [shape = 'u32[]', space=smem, size = 0x4, offset = 0x4, fixed_abs, tag = 'smem constant byte address 0x4 - core index']
  #allocation1 [shape = 'u32[144,128]{1,0:T(1,128)}', space=vmem, size = 0x12000, scoped, tag = 'internal scratch']
  #allocation2 [shape = 'f32[8,128]{1,0:T(8,128)}', space=vmem, size = 0x1000, scoped, tag = 'scratch operand']
  %s0 = inlined_call_operand.vmem [shape: bf16[8,1536], index: 0, kind: input, shape index: {}]
  %s1 = inlined_call_operand.vmem [shape: bf16[1536,128], index: 1, kind: input, shape index: {}]
  %s2 = inlined_call_operand.vmem [shape: f32[1,128], index: 2, kind: input, shape index: {}]
  %s3 = inlined_call_operand.vmem [shape: bf16[128,128], index: 3, kind: input, shape index: {}]
  %s4 = inlined_call_operand.vmem [shape: f32[1,128], index: 4, kind: input, shape index: {}]
  %s5 = inlined_call_operand.vmem [shape: bf16[128,256], index: 5, kind: input, shape index: {}]
  %s6 = inlined_call_operand.vmem [shape: f32[1,256], index: 6, kind: input, shape index: {}]
  %s7 = inlined_call_operand.hbm [shape: f32[8,256], index: 7, kind: output, shape index: {}]
  %s8 = sld [smem:[#allocation0]]
  $region69: #{eeg_to_latent_mlp.1} parent=0
    _
  %s10 = ssub.s32 1, %s8
  %s11 = scalar_select 0, %s10, %s8
  $region1: #{eeg_to_latent_mlp.1} parent=0
    #allocation3 [shape = 'u8[8192]{0}', space=vmem, size = 0x2000, scoped, tag = 'output window, operand 0, single buffered']
    #allocation4 [shape = 's32[2]{0}', space=sflag, size = 0x8, scoped, tag = 'scoped memory for eeg_to_latent_mlp.1']
    %12 = vsyncpa [#allocation4], 0
    loop: start=0, step=1, limit=5
    $region2: #{eeg_to_latent_mlp.1} parent=1 // loop_pre_header
      _
    $region3: #{eeg_to_latent_mlp.1} parent=1 // loop_header
      %s14 = sphi 0, %s18
      %p15 = scmp.ge.s32.totalorder %s14, 5
      %s21 = sphi 0, %s33
      %s22 = sphi 0, %s29
      %s23 = sphi 0, %s21
      %s24 = sphi 0, %s22
      %s25 = sphi 0, %s23
      %s26 = sphi 0, %s24
      %s38 = sphi 0, %s40
      %s41 = sphi 0, %s38
      %s42 = sphi 0, %s41
      %s58 = sphi 0, %s42
      %s64 = sphi 0, %s66
      %s67 = sphi 0, %s64
      %s68 = sphi 0, %s67
      %s84 = sphi 0, %s68
      %s88 = sphi 0, %s88
      %s90 = sphi 0, %s88
      %s91 = sphi 0, %s90
      %s105 = sphi 0, %s91
      %s109 = sphi 0, %s109
      %s111 = sphi 0, %s109
      %s112 = sphi 0, %s111
      %s126 = sphi 0, %s112
      %s130 = sphi 0, %s130
      %s132 = sphi 0, %s130
      %s133 = sphi 0, %s132
      %s147 = sphi 0, %s133
      %s151 = sphi 0, %s151
      %s153 = sphi 0, %s151
      %s154 = sphi 0, %s153
      %s168 = sphi 0, %s154
      %s172 = sphi 0, %s172
      %s174 = sphi 0, %s172
      %s175 = sphi 0, %s174
      %s189 = sphi 0, %s175
      %s195 = sphi 0, %s197
      %s198 = sphi 0, %s195
      %s199 = sphi 0, %s198
      %s215 = sphi 0, %s199
    $region4: #{eeg_to_latent_mlp.1} parent=1 // loop_header_branch
      %17 = sbr.rel (%p15) target = $region8
    $region5: #{eeg_to_latent_mlp.1} parent=1 // loop_body
      %s19 = ssub.s32 %s14, 1
      %s20 = ssub.s32 %s14, 2
      %s27 = sadd.s32 1, %s22
      %p28 = scmp.ge.s32.totalorder %s27, 3
      %s29 = scalar_select %p28, 0, %s27
      %s30 = sadd.s32 1, %s21
      %s31 = scalar_select %p28, %s30, %s21
      %p32 = scmp.ge.s32.totalorder %s31, 1
      %s33 = scalar_select %p32, 0, %s31
      %s34 = ssub.s32 %s21, %s33
      %s35 = ssub.s32 %s22, %s29
      %s36 = sor.u32 %s34, %s35
      %p37 = scmp.eq.s32.totalorder %s36, 0
      %s39 = sadd.s32 %s38, 1
      %s40 = scalar_select %p37, %s38, %s39
      %p43 = pneg %p37
      %p44 = scmp.eq.s32.totalorder %s14, 2
      %p45 = por %p43, %p44
      %p46 = scmp.ne.s32.totalorder %s38, %s41
      %p47 = scmp.eq.s32.totalorder %s14, 0
      %p48 = por %p46, %p47
      %p49 = scmp.ne.s32.totalorder %s38, %s41
      %p50 = scmp.eq.s32.totalorder %s19, 2
      %p51 = por %p49, %p50
      %p52 = scmp.ne.s32.totalorder %s41, %s42
      %p53 = scmp.eq.s32.totalorder %s19, 0
      %p54 = por %p52, %p53
      %p55 = scmp.ne.s32.totalorder %s41, %s42
      %p56 = scmp.eq.s32.totalorder %s20, 2
      %p57 = por %p55, %p56
      %p59 = scmp.ne.s32.totalorder %s42, %s58
      %p60 = scmp.eq.s32.totalorder %s20, 0
      %p61 = por %p59, %p60
      %s62 = ssub.s32 %s22, %s29
      %p63 = scmp.eq.s32.totalorder %s62, 0
      %s65 = sadd.s32 %s64, 1
      %s66 = scalar_select %p63, %s64, %s65
      %p69 = pneg %p63
      %p70 = scmp.eq.s32.totalorder %s14, 2
      %p71 = por %p69, %p70
      %p72 = scmp.ne.s32.totalorder %s64, %s67
      %p73 = scmp.eq.s32.totalorder %s14, 0
      %p74 = por %p72, %p73
      %p75 = scmp.ne.s32.totalorder %s64, %s67
      %p76 = scmp.eq.s32.totalorder %s19, 2
      %p77 = por %p75, %p76
      %p78 = scmp.ne.s32.totalorder %s67, %s68
      %p79 = scmp.eq.s32.totalorder %s19, 0
      %p80 = por %p78, %p79
      %p81 = scmp.ne.s32.totalorder %s67, %s68
      %p82 = scmp.eq.s32.totalorder %s20, 2
      %p83 = por %p81, %p82
      %p85 = scmp.ne.s32.totalorder %s68, %s84
      %p86 = scmp.eq.s32.totalorder %s20, 0
      %p87 = por %p85, %p86
      %s89 = sadd.s32 %s88, 1
      %p92 = scmp.eq.s32.totalorder %s14, 2
      %p93 = scmp.ne.s32.totalorder %s88, %s90
      %p94 = scmp.eq.s32.totalorder %s14, 0
      %p95 = por %p93, %p94
      %p96 = scmp.ne.s32.totalorder %s88, %s90
      %p97 = scmp.eq.s32.totalorder %s19, 2
      %p98 = por %p96, %p97
      %p99 = scmp.ne.s32.totalorder %s90, %s91
      %p100 = scmp.eq.s32.totalorder %s19, 0
      %p101 = por %p99, %p100
      %p102 = scmp.ne.s32.totalorder %s90, %s91
      %p103 = scmp.eq.s32.totalorder %s20, 2
      %p104 = por %p102, %p103
      %p106 = scmp.ne.s32.totalorder %s91, %s105
      %p107 = scmp.eq.s32.totalorder %s20, 0
      %p108 = por %p106, %p107
      %s110 = sadd.s32 %s109, 1
      %p113 = scmp.eq.s32.totalorder %s14, 2
      %p114 = scmp.ne.s32.totalorder %s109, %s111
      %p115 = scmp.eq.s32.totalorder %s14, 0
      %p116 = por %p114, %p115
      %p117 = scmp.ne.s32.totalorder %s109, %s111
      %p118 = scmp.eq.s32.totalorder %s19, 2
      %p119 = por %p117, %p118
      %p120 = scmp.ne.s32.totalorder %s111, %s112
      %p121 = scmp.eq.s32.totalorder %s19, 0
      %p122 = por %p120, %p121
      %p123 = scmp.ne.s32.totalorder %s111, %s112
      %p124 = scmp.eq.s32.totalorder %s20, 2
      %p125 = por %p123, %p124
      %p127 = scmp.ne.s32.totalorder %s112, %s126
      %p128 = scmp.eq.s32.totalorder %s20, 0
      %p129 = por %p127, %p128
      %s131 = sadd.s32 %s130, 1
      %p134 = scmp.eq.s32.totalorder %s14, 2
      %p135 = scmp.ne.s32.totalorder %s130, %s132
      %p136 = scmp.eq.s32.totalorder %s14, 0
      %p137 = por %p135, %p136
      %p138 = scmp.ne.s32.totalorder %s130, %s132
      %p139 = scmp.eq.s32.totalorder %s19, 2
      %p140 = por %p138, %p139
      %p141 = scmp.ne.s32.totalorder %s132, %s133
      %p142 = scmp.eq.s32.totalorder %s19, 0
      %p143 = por %p141, %p142
      %p144 = scmp.ne.s32.totalorder %s132, %s133
      %p145 = scmp.eq.s32.totalorder %s20, 2
      %p146 = por %p144, %p145
      %p148 = scmp.ne.s32.totalorder %s133, %s147
      %p149 = scmp.eq.s32.totalorder %s20, 0
      %p150 = por %p148, %p149
      %s152 = sadd.s32 %s151, 1
      %p155 = scmp.eq.s32.totalorder %s14, 2
      %p156 = scmp.ne.s32.totalorder %s151, %s153
      %p157 = scmp.eq.s32.totalorder %s14, 0
      %p158 = por %p156, %p157
      %p159 = scmp.ne.s32.totalorder %s151, %s153
      %p160 = scmp.eq.s32.totalorder %s19, 2
      %p161 = por %p159, %p160
      %p162 = scmp.ne.s32.totalorder %s153, %s154
      %p163 = scmp.eq.s32.totalorder %s19, 0
      %p164 = por %p162, %p163
      %p165 = scmp.ne.s32.totalorder %s153, %s154
      %p166 = scmp.eq.s32.totalorder %s20, 2
      %p167 = por %p165, %p166
      %p169 = scmp.ne.s32.totalorder %s154, %s168
      %p170 = scmp.eq.s32.totalorder %s20, 0
      %p171 = por %p169, %p170
      %s173 = sadd.s32 %s172, 1
      %p176 = scmp.eq.s32.totalorder %s14, 2
      %p177 = scmp.ne.s32.totalorder %s172, %s174
      %p178 = scmp.eq.s32.totalorder %s14, 0
      %p179 = por %p177, %p178
      %p180 = scmp.ne.s32.totalorder %s172, %s174
      %p181 = scmp.eq.s32.totalorder %s19, 2
      %p182 = por %p180, %p181
      %p183 = scmp.ne.s32.totalorder %s174, %s175
      %p184 = scmp.eq.s32.totalorder %s19, 0
      %p185 = por %p183, %p184
      %p186 = scmp.ne.s32.totalorder %s174, %s175
      %p187 = scmp.eq.s32.totalorder %s20, 2
      %p188 = por %p186, %p187
      %p190 = scmp.ne.s32.totalorder %s175, %s189
      %p191 = scmp.eq.s32.totalorder %s20, 0
      %p192 = por %p190, %p191
      %s193 = ssub.s32 %s21, %s33
      %p194 = scmp.eq.s32.totalorder %s193, 0
      %s196 = sadd.s32 %s195, 1
      %s197 = scalar_select %p194, %s195, %s196
      %p200 = pneg %p194
      %p201 = scmp.eq.s32.totalorder %s14, 2
      %p202 = por %p200, %p201
      %p203 = scmp.ne.s32.totalorder %s195, %s198
      %p204 = scmp.eq.s32.totalorder %s14, 0
      %p205 = por %p203, %p204
      %p206 = scmp.ne.s32.totalorder %s195, %s198
      %p207 = scmp.eq.s32.totalorder %s19, 2
      %p208 = por %p206, %p207
      %p209 = scmp.ne.s32.totalorder %s198, %s199
      %p210 = scmp.eq.s32.totalorder %s19, 0
      %p211 = por %p209, %p210
      %p212 = scmp.ne.s32.totalorder %s198, %s199
      %p213 = scmp.eq.s32.totalorder %s20, 2
      %p214 = por %p212, %p213
      %p216 = scmp.ne.s32.totalorder %s199, %s215
      %p217 = scmp.eq.s32.totalorder %s20, 0
      %p218 = por %p216, %p217
      %p219 = scmp.le.s32.totalorder 1, %s14
      %p220 = scmp.lt.s32.totalorder %s14, 4
      %p221 = pnand %p219, %p220
      %p222 = pneg %p221
      // Predicated region
      $region9: #{eeg_to_latent_mlp.1} parent=5 // pred_check
        _
      $region10: #{eeg_to_latent_mlp.1} parent=5 // pred_check_branch
        %224 = sbr.rel (%p221) target = $region12
      $region11: #{eeg_to_latent_mlp.1} parent=5 // pred_region
        %s225 = ssub.s32 %s14, 1
        // Predicated region
        $region13: #{eeg_to_latent_mlp.1} parent=11 // pred_check
          %p226 = pneg %p101
        $region14: #{eeg_to_latent_mlp.1} parent=11 // pred_check_branch
          %228 = sbr.rel (%p226) target = $region16
        $region15: #{eeg_to_latent_mlp.1} parent=11 // pred_region
          _
        $region16: #{eeg_to_latent_mlp.1} parent=11 // pred_fallthru
          _
        // Predicated region
        $region17: #{eeg_to_latent_mlp.1} parent=11 // pred_check
          %p229 = pneg %p122
        $region18: #{eeg_to_latent_mlp.1} parent=11 // pred_check_branch
          %231 = sbr.rel (%p229) target = $region20
        $region19: #{eeg_to_latent_mlp.1} parent=11 // pred_region
          _
        $region20: #{eeg_to_latent_mlp.1} parent=11 // pred_fallthru
          _
        // Predicated region
        $region21: #{eeg_to_latent_mlp.1} parent=11 // pred_check
          %p232 = pneg %p143
        $region22: #{eeg_to_latent_mlp.1} parent=11 // pred_check_branch
          %234 = sbr.rel (%p232) target = $region24
        $region23: #{eeg_to_latent_mlp.1} parent=11 // pred_region
          _
        $region24: #{eeg_to_latent_mlp.1} parent=11 // pred_fallthru
          _
        // Predicated region
        $region25: #{eeg_to_latent_mlp.1} parent=11 // pred_check
          %p235 = pneg %p164
        $region26: #{eeg_to_latent_mlp.1} parent=11 // pred_check_branch
          %237 = sbr.rel (%p235) target = $region28
        $region27: #{eeg_to_latent_mlp.1} parent=11 // pred_region
          _
        $region28: #{eeg_to_latent_mlp.1} parent=11 // pred_fallthru
          _
        // Predicated region
        $region29: #{eeg_to_latent_mlp.1} parent=11 // pred_check
          %p238 = pneg %p185
        $region30: #{eeg_to_latent_mlp.1} parent=11 // pred_check_branch
          %240 = sbr.rel (%p238) target = $region32
        $region31: #{eeg_to_latent_mlp.1} parent=11 // pred_region
          _
        $region32: #{eeg_to_latent_mlp.1} parent=11 // pred_fallthru
          _
      $region12: #{eeg_to_latent_mlp.1} parent=5 // pred_fallthru
        _
      %p241 = scmp.lt.s32.totalorder %s14, 3
      // Predicated region
      $region33: #{eeg_to_latent_mlp.1} parent=5 // pred_check
        %p242 = pneg %p241
      $region34: #{eeg_to_latent_mlp.1} parent=5 // pred_check_branch
        %244 = sbr.rel (%p242) target = $region36
      $region35: #{eeg_to_latent_mlp.1} parent=5 // pred_region
        // Predicated region
        $region37: #{eeg_to_latent_mlp.1} parent=35 // pred_check
          %p245 = pneg %p48
        $region38: #{eeg_to_latent_mlp.1} parent=35 // pred_check_branch
          %247 = sbr.rel (%p245) target = $region40
        $region39: #{eeg_to_latent_mlp.1} parent=35 // pred_region
          %s248 = smul.u32 4, %s22
          %p249 = scmp.lt.s32.totalorder %s21, 0
          %s250 = scalar_select %p249, %s21, 0
          %p251 = scmp.lt.s32.totalorder %s248, 11
          %s252 = scalar_select %p251, %s248, 11
          %s253 = smul.addr %s250, 12
          %s254 = sadd.s32 %s252, %s253
          %s255 = smul.addr %s254, 4
          %s256 = scalar_lea.vmem %s0, %s255
          %s257 = smul.u32 4, %s22
        $region40: #{eeg_to_latent_mlp.1} parent=35 // pred_fallthru
          _
        // Predicated region
        $region41: #{eeg_to_latent_mlp.1} parent=35 // pred_check
          %p258 = pneg %p74
        $region42: #{eeg_to_latent_mlp.1} parent=35 // pred_check_branch
          %260 = sbr.rel (%p258) target = $region44
        $region43: #{eeg_to_latent_mlp.1} parent=35 // pred_region
          %s261 = smul.u32 64, %s22
          %p262 = scmp.lt.s32.totalorder %s261, 191
          %s263 = scalar_select %p262, %s261, 191
          %s264 = smul.addr %s263, 4
          %s265 = scalar_lea.vmem %s1, %s264
          %s266 = smul.u32 64, %s22
        $region44: #{eeg_to_latent_mlp.1} parent=35 // pred_fallthru
          _
      $region36: #{eeg_to_latent_mlp.1} parent=5 // pred_fallthru
        _
      %p267 = scmp.le.s32.totalorder 1, %s14
      %p268 = scmp.lt.s32.totalorder %s14, 4
      %p269 = pnand %p267, %p268
      %p270 = pneg %p269
      // Predicated region
      $region45: #{eeg_to_latent_mlp.1} parent=5 // pred_check
        _
      $region46: #{eeg_to_latent_mlp.1} parent=5 // pred_check_branch
        %272 = sbr.rel (%p269) target = $region48
      $region47: #{eeg_to_latent_mlp.1} parent=5 // pred_region
        %s273 = ssub.s32 %s14, 1
        %s274 = smul.u32 4, %s24
        %p275 = scmp.lt.s32.totalorder %s23, 0
        %s276 = scalar_select %p275, %s23, 0
        %p277 = scmp.lt.s32.totalorder %s274, 11
        %s278 = scalar_select %p277, %s274, 11
        %s279 = smul.addr %s276, 12
        %s280 = sadd.s32 %s278, %s279
        %s281 = smul.addr %s280, 4
        %s282 = scalar_lea.vmem %s0, %s281
        %p283 = pneg %p54
        %p284 = pneg %p51
        %s285 = smul.u32 64, %s24
        %p286 = scmp.lt.s32.totalorder %s285, 191
        %s287 = scalar_select %p286, %s285, 191
        %s288 = smul.addr %s287, 4
        %s289 = scalar_lea.vmem %s1, %s288
        %p290 = pneg %p80
        %p291 = pneg %p77
        %p292 = pneg %p101
        %p293 = pneg %p98
        %p294 = pneg %p122
        %p295 = pneg %p119
        %p296 = pneg %p143
        %p297 = pneg %p140
        %p298 = pneg %p164
        %p299 = pneg %p161
        %p300 = pneg %p185
        %p301 = pneg %p182
        %p302 = pneg %p211
        %p303 = pneg %p208
        %s304 = smul.u32 4, %s24
        %p305 = scmp.lt.s32.totalorder %s23, 0
        %s306 = scalar_select %p305, %s23, 0
        %p307 = scmp.lt.s32.totalorder %s304, 11
        %s308 = scalar_select %p307, %s304, 11
        %s309 = smul.addr %s306, 12
        %s310 = sadd.s32 %s308, %s309
        %s311 = smul.addr %s310, 4
        %s312 = scalar_lea.vmem %s0, %s311
        %s313 = smul.u32 4, %s24
        %s314 = smul.u32 64, %s24
        %p315 = scmp.lt.s32.totalorder %s314, 191
        %s316 = scalar_select %p315, %s314, 191
        %s317 = smul.addr %s316, 4
        %s318 = scalar_lea.vmem %s1, %s317
        %s319 = smul.u32 64, %s24
        %p321 = scmp.eq.s32.totalorder %s24, 0
        // Predicated region
        $region49: #{eeg_to_latent_mlp.1} parent=47 // pred_check
          %p322 = pneg %p321
        $region50: #{eeg_to_latent_mlp.1} parent=47 // pred_check_branch
          %324 = sbr.rel (%p322) target = $region52
        $region51: #{eeg_to_latent_mlp.1} parent=47 // pred_region
          %325 = vst [vmem:[#allocation2] sm:$0xff] 0.0
        $region52: #{eeg_to_latent_mlp.1} parent=47 // pred_fallthru
          _
        %v326 = vld [vmem:[#allocation2] sm:$0xff]
        %v327 = vld [vmem:[%s312] sm:$0xff]
        %v328 = vld [vmem:[%s312 + $0x8] sm:$0xff]
        %v329 = vld [vmem:[%s318] sm:$0xf]
        %v330 = vld [vmem:[%s318 + $0x4] sm:$0xf]
        %v331 = vld [vmem:[%s318 + $0x8] sm:$0xf]
        %v332 = vld [vmem:[%s318 + $0xc] sm:$0xf]
        %v333 = vld [vmem:[%s318 + $0x10] sm:$0xf]
        %v334 = vld [vmem:[%s318 + $0x14] sm:$0xf]
        %v335 = vld [vmem:[%s318 + $0x18] sm:$0xf]
        %v336 = vld [vmem:[%s318 + $0x1c] sm:$0xf]
        %v337 = vld [vmem:[%s318 + $0x20] sm:$0xf]
        %v338 = vld [vmem:[%s318 + $0x24] sm:$0xf]
        %v339 = vld [vmem:[%s318 + $0x28] sm:$0xf]
        %v340 = vld [vmem:[%s318 + $0x2c] sm:$0xf]
        %v341 = vld [vmem:[%s318 + $0x30] sm:$0xf]
        %v342 = vld [vmem:[%s318 + $0x34] sm:$0xf]
        %v343 = vld [vmem:[%s318 + $0x38] sm:$0xf]
        %v344 = vld [vmem:[%s318 + $0x3c] sm:$0xf]
        %v345 = vld [vmem:[%s318 + $0x40] sm:$0xf]
        %v346 = vld [vmem:[%s318 + $0x44] sm:$0xf]
        %v347 = vld [vmem:[%s318 + $0x48] sm:$0xf]
        %v348 = vld [vmem:[%s318 + $0x4c] sm:$0xf]
        %v349 = vld [vmem:[%s318 + $0x50] sm:$0xf]
        %v350 = vld [vmem:[%s318 + $0x54] sm:$0xf]
        %v351 = vld [vmem:[%s318 + $0x58] sm:$0xf]
        %v352 = vld [vmem:[%s318 + $0x5c] sm:$0xf]
        %v353 = vld [vmem:[%s318 + $0x60] sm:$0xf]
        %v354 = vld [vmem:[%s318 + $0x64] sm:$0xf]
        %v355 = vld [vmem:[%s318 + $0x68] sm:$0xf]
        %v356 = vld [vmem:[%s318 + $0x6c] sm:$0xf]
        %v357 = vld [vmem:[%s318 + $0x70] sm:$0xf]
        %v358 = vld [vmem:[%s318 + $0x74] sm:$0xf]
        %v359 = vld [vmem:[%s318 + $0x78] sm:$0xf]
        %v360 = vld [vmem:[%s318 + $0x7c] sm:$0xf]
        %v361 = vld [vmem:[%s318 + $0x80] sm:$0xf]
        %v362 = vld [vmem:[%s318 + $0x84] sm:$0xf]
        %v363 = vld [vmem:[%s318 + $0x88] sm:$0xf]
        %v364 = vld [vmem:[%s318 + $0x8c] sm:$0xf]
        %v365 = vld [vmem:[%s318 + $0x90] sm:$0xf]
        %v366 = vld [vmem:[%s318 + $0x94] sm:$0xf]
        %v367 = vld [vmem:[%s318 + $0x98] sm:$0xf]
        %v368 = vld [vmem:[%s318 + $0x9c] sm:$0xf]
        %v369 = vld [vmem:[%s318 + $0xa0] sm:$0xf]
        %v370 = vld [vmem:[%s318 + $0xa4] sm:$0xf]
        %v371 = vld [vmem:[%s318 + $0xa8] sm:$0xf]
        %v372 = vld [vmem:[%s318 + $0xac] sm:$0xf]
        %v373 = vld [vmem:[%s318 + $0xb0] sm:$0xf]
        %v374 = vld [vmem:[%s318 + $0xb4] sm:$0xf]
        %v375 = vld [vmem:[%s318 + $0xb8] sm:$0xf]
        %v376 = vld [vmem:[%s318 + $0xbc] sm:$0xf]
        %v377 = vld [vmem:[%s318 + $0xc0] sm:$0xf]
        %v378 = vld [vmem:[%s318 + $0xc4] sm:$0xf]
        %v379 = vld [vmem:[%s318 + $0xc8] sm:$0xf]
        %v380 = vld [vmem:[%s318 + $0xcc] sm:$0xf]
        %v381 = vld [vmem:[%s318 + $0xd0] sm:$0xf]
        %v382 = vld [vmem:[%s318 + $0xd4] sm:$0xf]
        %v383 = vld [vmem:[%s318 + $0xd8] sm:$0xf]
        %v384 = vld [vmem:[%s318 + $0xdc] sm:$0xf]
        %v385 = vld [vmem:[%s318 + $0xe0] sm:$0xf]
        %v386 = vld [vmem:[%s318 + $0xe4] sm:$0xf]
        %v387 = vld [vmem:[%s318 + $0xe8] sm:$0xf]
        %v388 = vld [vmem:[%s318 + $0xec] sm:$0xf]
        %v389 = vld [vmem:[%s318 + $0xf0] sm:$0xf]
        %v390 = vld [vmem:[%s318 + $0xf4] sm:$0xf]
        %v391 = vld [vmem:[%s318 + $0xf8] sm:$0xf]
        %v392 = vld [vmem:[%s318 + $0xfc] sm:$0xf]
        %v395 = vunpack.c.l.b16 %v327
        %v396 = vunpack.c.h.b16 %v327
        %v397 = vunpack.c.l.b16 %v328
        %v398 = vunpack.c.h.b16 %v328
        %v399 = vpack.c.b16 %v395, %v395
        %v400 = vpack.c.b16 %v396, %v396
        %v401 = vpack.c.b16 %v397, %v397
        %v402 = vpack.c.b16 %v398, %v398
        %v471 = vunpack.c.l.b16 %v329
        %v472 = vunpack.c.l.b16 %v330
        %v473 = vunpack.c.l.b16 %v331
        %v474 = vunpack.c.l.b16 %v332
        %v475 = vunpack.c.l.b16 %v333
        %v476 = vunpack.c.l.b16 %v334
        %v477 = vunpack.c.l.b16 %v335
        %v478 = vunpack.c.l.b16 %v336
        %v479 = vunpack.c.l.b16 %v337
        %v480 = vunpack.c.l.b16 %v338
        %v481 = vunpack.c.l.b16 %v339
        %v482 = vunpack.c.l.b16 %v340
        %v483 = vunpack.c.l.b16 %v341
        %v484 = vunpack.c.l.b16 %v342
        %v485 = vunpack.c.l.b16 %v343
        %v486 = vunpack.c.l.b16 %v344
        %v487 = vunpack.c.l.b16 %v345
        %v488 = vunpack.c.l.b16 %v346
        %v489 = vunpack.c.l.b16 %v347
        %v490 = vunpack.c.l.b16 %v348
        %v491 = vunpack.c.l.b16 %v349
        %v492 = vunpack.c.l.b16 %v350
        %v493 = vunpack.c.l.b16 %v351
        %v494 = vunpack.c.l.b16 %v352
        %v495 = vunpack.c.l.b16 %v353
        %v496 = vunpack.c.l.b16 %v354
        %v497 = vunpack.c.l.b16 %v355
        %v498 = vunpack.c.l.b16 %v356
        %v499 = vunpack.c.l.b16 %v357
        %v500 = vunpack.c.l.b16 %v358
        %v501 = vunpack.c.l.b16 %v359
        %v502 = vunpack.c.l.b16 %v360
        %v503 = vunpack.c.l.b16 %v361
        %v504 = vunpack.c.l.b16 %v362
        %v505 = vunpack.c.l.b16 %v363
        %v506 = vunpack.c.l.b16 %v364
        %v507 = vunpack.c.l.b16 %v365
        %v508 = vunpack.c.l.b16 %v366
        %v509 = vunpack.c.l.b16 %v367
        %v510 = vunpack.c.l.b16 %v368
        %v511 = vunpack.c.l.b16 %v369
        %v512 = vunpack.c.l.b16 %v370
        %v513 = vunpack.c.l.b16 %v371
        %v514 = vunpack.c.l.b16 %v372
        %v515 = vunpack.c.l.b16 %v373
        %v516 = vunpack.c.l.b16 %v374
        %v517 = vunpack.c.l.b16 %v375
        %v518 = vunpack.c.l.b16 %v376
        %v519 = vunpack.c.l.b16 %v377
        %v520 = vunpack.c.l.b16 %v378
        %v521 = vunpack.c.l.b16 %v379
        %v522 = vunpack.c.l.b16 %v380
        %v523 = vunpack.c.l.b16 %v381
        %v524 = vunpack.c.l.b16 %v382
        %v525 = vunpack.c.l.b16 %v383
        %v526 = vunpack.c.l.b16 %v384
        %v527 = vunpack.c.l.b16 %v385
        %v528 = vunpack.c.l.b16 %v386
        %v529 = vunpack.c.l.b16 %v387
        %v530 = vunpack.c.l.b16 %v388
        %v531 = vunpack.c.l.b16 %v389
        %v532 = vunpack.c.l.b16 %v390
        %v533 = vunpack.c.l.b16 %v391
        %v534 = vunpack.c.l.b16 %v392
        %v535 = vpack.c.b16 %v472, %v471
        %v536 = vpack.c.b16 %v474, %v473
        %v537 = vpack.c.b16 %v476, %v475
        %v538 = vpack.c.b16 %v478, %v477
        %v539 = vpack.c.b16 %v480, %v479
        %v540 = vpack.c.b16 %v482, %v481
        %v541 = vpack.c.b16 %v484, %v483
        %v542 = vpack.c.b16 %v486, %v485
        %v543 = vpack.c.b16 %v488, %v487
        %v544 = vpack.c.b16 %v490, %v489
        %v545 = vpack.c.b16 %v492, %v491
        %v546 = vpack.c.b16 %v494, %v493
        %v547 = vpack.c.b16 %v496, %v495
        %v548 = vpack.c.b16 %v498, %v497
        %v549 = vpack.c.b16 %v500, %v499
        %v550 = vpack.c.b16 %v502, %v501
        %v551 = vpack.c.b16 %v504, %v503
        %v552 = vpack.c.b16 %v506, %v505
        %v553 = vpack.c.b16 %v508, %v507
        %v554 = vpack.c.b16 %v510, %v509
        %v555 = vpack.c.b16 %v512, %v511
        %v556 = vpack.c.b16 %v514, %v513
        %v557 = vpack.c.b16 %v516, %v515
        %v558 = vpack.c.b16 %v518, %v517
        %v559 = vpack.c.b16 %v520, %v519
        %v560 = vpack.c.b16 %v522, %v521
        %v561 = vpack.c.b16 %v524, %v523
        %v562 = vpack.c.b16 %v526, %v525
        %v563 = vpack.c.b16 %v528, %v527
        %v564 = vpack.c.b16 %v530, %v529
        %v565 = vpack.c.b16 %v532, %v531
        %v566 = vpack.c.b16 %v534, %v533
        %599 = vmatprep.subr.bf16.mxu0 0
        %600 = vmatpush1.bf16.msra.mxu0 %v535
        %601 = vmatprep.subr.bf16.mxu0 0
        %602 = vmatpush1.bf16.msra.mxu0 %v536
        %603 = vmatprep.subr.bf16.mxu0 0
        %604 = vmatpush1.bf16.msra.mxu0 %v537
        %605 = vmatprep.subr.bf16.mxu0 0
        %606 = vmatpush1.bf16.msra.mxu0 %v538
        %607 = vmatprep.subr.bf16.mxu0 0
        %608 = vmatpush1.bf16.msra.mxu0 %v539
        %609 = vmatprep.subr.bf16.mxu0 0
        %610 = vmatpush1.bf16.msra.mxu0 %v540
        %611 = vmatprep.subr.bf16.mxu0 0
        %612 = vmatpush1.bf16.msra.mxu0 %v541
        %613 = vmatprep.subr.bf16.mxu0 0
        %614 = vmatpush1.bf16.msra.mxu0 %v542
        %615 = vmatprep.subr.bf16.mxu0 0
        %616 = vmatpush1.bf16.msra.mxu0 %v543
        %617 = vmatprep.subr.bf16.mxu0 0
        %618 = vmatpush1.bf16.msra.mxu0 %v544
        %619 = vmatprep.subr.bf16.mxu0 0
        %620 = vmatpush1.bf16.msra.mxu0 %v545
        %621 = vmatprep.subr.bf16.mxu0 0
        %622 = vmatpush1.bf16.msra.mxu0 %v546
        %623 = vmatprep.subr.bf16.mxu0 0
        %624 = vmatpush1.bf16.msra.mxu0 %v547
        %625 = vmatprep.subr.bf16.mxu0 0
        %626 = vmatpush1.bf16.msra.mxu0 %v548
        %627 = vmatprep.subr.bf16.mxu0 0
        %628 = vmatpush1.bf16.msra.mxu0 %v549
        %629 = vmatprep.subr.bf16.mxu0 0
        %630 = vmatpush1.bf16.msra.mxu0 %v550
        %631 = vmatprep.mubr.bf16.mxu0 %v400
        %632 = vmatmul.mubr.bf16.gmra.mrb[0].mxu0 %v399
        %v633 = vpop.f32.mrb[0].mxu0
        %v634 = vadd.f32 0.0, %v633
        %v635 = vpop.f32.mrb[0].mxu0
        %v636 = vpop.f32.mrb[0].mxu0
        %v637 = vpop.f32.mrb[0].mxu0
        %638 = vdwg.mxu0
        %639 = vmatprep.subr.bf16.mxu0 0
        %640 = vmatpush1.bf16.msra.mxu0 %v551
        %641 = vmatprep.subr.bf16.mxu0 0
        %642 = vmatpush1.bf16.msra.mxu0 %v552
        %643 = vmatprep.subr.bf16.mxu0 0
        %644 = vmatpush1.bf16.msra.mxu0 %v553
        %645 = vmatprep.subr.bf16.mxu0 0
        %646 = vmatpush1.bf16.msra.mxu0 %v554
        %647 = vmatprep.subr.bf16.mxu0 0
        %648 = vmatpush1.bf16.msra.mxu0 %v555
        %649 = vmatprep.subr.bf16.mxu0 0
        %650 = vmatpush1.bf16.msra.mxu0 %v556
        %651 = vmatprep.subr.bf16.mxu0 0
        %652 = vmatpush1.bf16.msra.mxu0 %v557
        %653 = vmatprep.subr.bf16.mxu0 0
        %654 = vmatpush1.bf16.msra.mxu0 %v558
        %655 = vmatprep.subr.bf16.mxu0 0
        %656 = vmatpush1.bf16.msra.mxu0 %v559
        %657 = vmatprep.subr.bf16.mxu0 0
        %658 = vmatpush1.bf16.msra.mxu0 %v560
        %659 = vmatprep.subr.bf16.mxu0 0
        %660 = vmatpush1.bf16.msra.mxu0 %v561
        %661 = vmatprep.subr.bf16.mxu0 0
        %662 = vmatpush1.bf16.msra.mxu0 %v562
        %663 = vmatprep.subr.bf16.mxu0 0
        %664 = vmatpush1.bf16.msra.mxu0 %v563
        %665 = vmatprep.subr.bf16.mxu0 0
        %666 = vmatpush1.bf16.msra.mxu0 %v564
        %667 = vmatprep.subr.bf16.mxu0 0
        %668 = vmatpush1.bf16.msra.mxu0 %v565
        %669 = vmatprep.subr.bf16.mxu0 0
        %670 = vmatpush1.bf16.msra.mxu0 %v566
        %671 = vmatprep.mubr.bf16.mxu0 %v402
        %672 = vmatmul.mubr.bf16.gmra.mrb[0].mxu0 %v401
        %v673 = vpop.f32.mrb[0].mxu0
        %v674 = vadd.f32 %v634, %v673
        %v675 = vpop.f32.mrb[0].mxu0
        %v676 = vpop.f32.mrb[0].mxu0
        %v677 = vpop.f32.mrb[0].mxu0
        %678 = vdwg.mxu0
        %v679 = vadd.f32 %v326, %v674
        %680 = vst [vmem:[#allocation2] sm:$0xff] %v679
        %p681 = scmp.eq.s32.totalorder %s24, 2
        // Predicated region
        $region53: #{eeg_to_latent_mlp.1} parent=47 // pred_check
          %p682 = pneg %p681
        $region54: #{eeg_to_latent_mlp.1} parent=47 // pred_check_branch
          %684 = sbr.rel (%p682) target = $region56
        $region55: #{eeg_to_latent_mlp.1} parent=47 // pred_region
          %v685 = vld [vmem:[#allocation2] sm:$0xff]
          %v686 = vld [vmem:[%s2] sm:$0x1]
          %v688 = vlaneseq
          %v689 = vshrl.u32 %v688, 7
          %v690 = vsub.s32 0, %v689
          %v691 = vrot.slane %v686, %v690
          %v693 = vadd.f32 %v685, %v691
          %vm694 = vcmp.ge.f32.partialorder %v693, 0.0
          %v695 = vmul.f32 %v693, 0.01
          %v696 = vsel %vm694, %v693, %v695
          %v697 = vld [vmem:[%s3] sm:$0xf]
          %v698 = vld [vmem:[%s3 + $0x4] sm:$0xf]
          %v699 = vld [vmem:[%s3 + $0x8] sm:$0xf]
          %v700 = vld [vmem:[%s3 + $0xc] sm:$0xf]
          %v701 = vld [vmem:[%s3 + $0x10] sm:$0xf]
          %v702 = vld [vmem:[%s3 + $0x14] sm:$0xf]
          %v703 = vld [vmem:[%s3 + $0x18] sm:$0xf]
          %v704 = vld [vmem:[%s3 + $0x1c] sm:$0xf]
          %v705 = vld [vmem:[%s3 + $0x20] sm:$0xf]
          %v706 = vld [vmem:[%s3 + $0x24] sm:$0xf]
          %v707 = vld [vmem:[%s3 + $0x28] sm:$0xf]
          %v708 = vld [vmem:[%s3 + $0x2c] sm:$0xf]
          %v709 = vld [vmem:[%s3 + $0x30] sm:$0xf]
          %v710 = vld [vmem:[%s3 + $0x34] sm:$0xf]
          %v711 = vld [vmem:[%s3 + $0x38] sm:$0xf]
          %v712 = vld [vmem:[%s3 + $0x3c] sm:$0xf]
          %v713 = vld [vmem:[%s4] sm:$0x1]
          %v714 = vpack.c.bf16 %v696, %v696
          %v716 = vlaneseq
          %v717 = vshrl.u32 %v716, 7
          %v718 = vsub.s32 0, %v717
          %v719 = vrot.slane %v713, %v718
          %v737 = vunpack.c.l.b16 %v697
          %v738 = vunpack.c.l.b16 %v698
          %v739 = vunpack.c.l.b16 %v699
          %v740 = vunpack.c.l.b16 %v700
          %v741 = vunpack.c.l.b16 %v701
          %v742 = vunpack.c.l.b16 %v702
          %v743 = vunpack.c.l.b16 %v703
          %v744 = vunpack.c.l.b16 %v704
          %v745 = vunpack.c.l.b16 %v705
          %v746 = vunpack.c.l.b16 %v706
          %v747 = vunpack.c.l.b16 %v707
          %v748 = vunpack.c.l.b16 %v708
          %v749 = vunpack.c.l.b16 %v709
          %v750 = vunpack.c.l.b16 %v710
          %v751 = vunpack.c.l.b16 %v711
          %v752 = vunpack.c.l.b16 %v712
          %v753 = vpack.c.b16 %v738, %v737
          %v754 = vpack.c.b16 %v740, %v739
          %v755 = vpack.c.b16 %v742, %v741
          %v756 = vpack.c.b16 %v744, %v743
          %v757 = vpack.c.b16 %v746, %v745
          %v758 = vpack.c.b16 %v748, %v747
          %v759 = vpack.c.b16 %v750, %v749
          %v760 = vpack.c.b16 %v752, %v751
          %769 = vmatprep.subr.bf16.mxu0 0
          %770 = vmatpush1.bf16.msra.mxu0 %v753
          %771 = vmatprep.subr.bf16.mxu0 0
          %772 = vmatpush1.bf16.msra.mxu0 %v754
          %773 = vmatprep.subr.bf16.mxu0 0
          %774 = vmatpush1.bf16.msra.mxu0 %v755
          %775 = vmatprep.subr.bf16.mxu0 0
          %776 = vmatpush1.bf16.msra.mxu0 %v756
          %777 = vmatprep.subr.bf16.mxu0 0
          %778 = vmatpush1.bf16.msra.mxu0 %v757
          %779 = vmatprep.subr.bf16.mxu0 0
          %780 = vmatpush1.bf16.msra.mxu0 %v758
          %781 = vmatprep.subr.bf16.mxu0 0
          %782 = vmatpush1.bf16.msra.mxu0 %v759
          %783 = vmatprep.subr.bf16.mxu0 0
          %784 = vmatpush1.bf16.msra.mxu0 %v760
          %785 = vmatprep.subr.bf16.mxu0 0
          %786 = vmatpush1.bf16.msra.mxu0 0
          %787 = vmatprep.subr.bf16.mxu0 0
          %788 = vmatpush1.bf16.msra.mxu0 0
          %789 = vmatprep.subr.bf16.mxu0 0
          %790 = vmatpush1.bf16.msra.mxu0 0
          %791 = vmatprep.subr.bf16.mxu0 0
          %792 = vmatpush1.bf16.msra.mxu0 0
          %793 = vmatprep.subr.bf16.mxu0 0
          %794 = vmatpush1.bf16.msra.mxu0 0
          %795 = vmatprep.subr.bf16.mxu0 0
          %796 = vmatpush1.bf16.msra.mxu0 0
          %797 = vmatprep.subr.bf16.mxu0 0
          %798 = vmatpush1.bf16.msra.mxu0 0
          %799 = vmatprep.subr.bf16.mxu0 0
          %800 = vmatpush1.bf16.msra.mxu0 0
          %801 = vmatprep.mubr.bf16.mxu0 0
          %802 = vmatmul.mubr.bf16.gmra.mrb[0].mxu0 %v714
          %v803 = vpop.f32.mrb[0].mxu0
          %v804 = vadd.f32 %v719, %v803
          %v805 = vpop.f32.mrb[0].mxu0
          %v806 = vpop.f32.mrb[0].mxu0
          %v807 = vpop.f32.mrb[0].mxu0
          %808 = vdwg.mxu0
          %vm809 = vcmp.ge.f32.partialorder %v804, 0.0
          %v810 = vmul.f32 %v804, 0.01
          %v811 = vsel %vm809, %v804, %v810
          %v812 = vld [vmem:[%s5] sm:$0xff]
          %v813 = vld [vmem:[%s5 + $0x8] sm:$0xff]
          %v814 = vld [vmem:[%s5 + $0x10] sm:$0xff]
          %v815 = vld [vmem:[%s5 + $0x18] sm:$0xff]
          %v816 = vld [vmem:[%s5 + $0x20] sm:$0xff]
          %v817 = vld [vmem:[%s5 + $0x28] sm:$0xff]
          %v818 = vld [vmem:[%s5 + $0x30] sm:$0xff]
          %v819 = vld [vmem:[%s5 + $0x38] sm:$0xff]
          %v820 = vld [vmem:[%s5 + $0x40] sm:$0xff]
          %v821 = vld [vmem:[%s5 + $0x48] sm:$0xff]
          %v822 = vld [vmem:[%s5 + $0x50] sm:$0xff]
          %v823 = vld [vmem:[%s5 + $0x58] sm:$0xff]
          %v824 = vld [vmem:[%s5 + $0x60] sm:$0xff]
          %v825 = vld [vmem:[%s5 + $0x68] sm:$0xff]
          %v826 = vld [vmem:[%s5 + $0x70] sm:$0xff]
          %v827 = vld [vmem:[%s5 + $0x78] sm:$0xff]
          %v828 = vld [vmem:[%s6] sm:$0x3]
          %v829 = vpack.c.bf16 %v811, %v811
          %v831 = vlaneseq
          %v832 = vshrl.u32 %v831, 7
          %v833 = vsub.s32 0, %v832
          %v834 = vrot.slane %v828, %v833
          %v835 = vlaneseq
          %v836 = vshrl.u32 %v835, 7
          %v837 = vsub.s32 1, %v836
          %v838 = vrot.slane %v828, %v837
          %v857 = vunpack.c.l.b16 %v812
          %v858 = vunpack.c.h.b16 %v812
          %v859 = vunpack.c.l.b16 %v813
          %v860 = vunpack.c.h.b16 %v813
          %v861 = vunpack.c.l.b16 %v814
          %v862 = vunpack.c.h.b16 %v814
          %v863 = vunpack.c.l.b16 %v815
          %v864 = vunpack.c.h.b16 %v815
          %v865 = vunpack.c.l.b16 %v816
          %v866 = vunpack.c.h.b16 %v816
          %v867 = vunpack.c.l.b16 %v817
          %v868 = vunpack.c.h.b16 %v817
          %v869 = vunpack.c.l.b16 %v818
          %v870 = vunpack.c.h.b16 %v818
          %v871 = vunpack.c.l.b16 %v819
          %v872 = vunpack.c.h.b16 %v819
          %v873 = vunpack.c.l.b16 %v820
          %v874 = vunpack.c.h.b16 %v820
          %v875 = vunpack.c.l.b16 %v821
          %v876 = vunpack.c.h.b16 %v821
          %v877 = vunpack.c.l.b16 %v822
          %v878 = vunpack.c.h.b16 %v822
          %v879 = vunpack.c.l.b16 %v823
          %v880 = vunpack.c.h.b16 %v823
          %v881 = vunpack.c.l.b16 %v824
          %v882 = vunpack.c.h.b16 %v824
          %v883 = vunpack.c.l.b16 %v825
          %v884 = vunpack.c.h.b16 %v825
          %v885 = vunpack.c.l.b16 %v826
          %v886 = vunpack.c.h.b16 %v826
          %v887 = vunpack.c.l.b16 %v827
          %v888 = vunpack.c.h.b16 %v827
          %v889 = vpack.c.b16 %v859, %v857
          %v890 = vpack.c.b16 %v860, %v858
          %v891 = vpack.c.b16 %v863, %v861
          %v892 = vpack.c.b16 %v864, %v862
          %v893 = vpack.c.b16 %v867, %v865
          %v894 = vpack.c.b16 %v868, %v866
          %v895 = vpack.c.b16 %v871, %v869
          %v896 = vpack.c.b16 %v872, %v870
          %v897 = vpack.c.b16 %v875, %v873
          %v898 = vpack.c.b16 %v876, %v874
          %v899 = vpack.c.b16 %v879, %v877
          %v900 = vpack.c.b16 %v880, %v878
          %v901 = vpack.c.b16 %v883, %v881
          %v902 = vpack.c.b16 %v884, %v882
          %v903 = vpack.c.b16 %v887, %v885
          %v904 = vpack.c.b16 %v888, %v886
          %921 = vmatprep.subr.bf16.mxu0 %v890
          %922 = vmatpush1.bf16.msra.mxu0 %v889
          %923 = vmatprep.subr.bf16.mxu0 %v892
          %924 = vmatpush1.bf16.msra.mxu0 %v891
          %925 = vmatprep.subr.bf16.mxu0 %v894
          %926 = vmatpush1.bf16.msra.mxu0 %v893
          %927 = vmatprep.subr.bf16.mxu0 %v896
          %928 = vmatpush1.bf16.msra.mxu0 %v895
          %929 = vmatprep.subr.bf16.mxu0 %v898
          %930 = vmatpush1.bf16.msra.mxu0 %v897
          %931 = vmatprep.subr.bf16.mxu0 %v900
          %932 = vmatpush1.bf16.msra.mxu0 %v899
          %933 = vmatprep.subr.bf16.mxu0 %v902
          %934 = vmatpush1.bf16.msra.mxu0 %v901
          %935 = vmatprep.subr.bf16.mxu0 %v904
          %936 = vmatpush1.bf16.msra.mxu0 %v903
          %937 = vmatprep.subr.bf16.mxu0 0
          %938 = vmatpush1.bf16.msra.mxu0 0
          %939 = vmatprep.subr.bf16.mxu0 0
          %940 = vmatpush1.bf16.msra.mxu0 0
          %941 = vmatprep.subr.bf16.mxu0 0
          %942 = vmatpush1.bf16.msra.mxu0 0
          %943 = vmatprep.subr.bf16.mxu0 0
          %944 = vmatpush1.bf16.msra.mxu0 0
          %945 = vmatprep.subr.bf16.mxu0 0
          %946 = vmatpush1.bf16.msra.mxu0 0
          %947 = vmatprep.subr.bf16.mxu0 0
          %948 = vmatpush1.bf16.msra.mxu0 0
          %949 = vmatprep.subr.bf16.mxu0 0
          %950 = vmatpush1.bf16.msra.mxu0 0
          %951 = vmatprep.subr.bf16.mxu0 0
          %952 = vmatpush1.bf16.msra.mxu0 0
          %953 = vmatprep.mubr.bf16.mxu0 0
          %954 = vmatmul.mubr.bf16.gmra.mrb[0].mxu0 %v829
          %v955 = vpop.f32.mrb[0].mxu0
          %v956 = vadd.f32 %v834, %v955
          %v957 = vpop.f32.mrb[0].mxu0
          %v958 = vadd.f32 %v838, %v957
          %v959 = vpop.f32.mrb[0].mxu0
          %v960 = vpop.f32.mrb[0].mxu0
          %961 = vdwg.mxu0
          %962 = vst [vmem:[#allocation3] sm:$0xff] %v956
          %963 = vst [vmem:[#allocation3 + $0x8] sm:$0xff] %v958
        $region56: #{eeg_to_latent_mlp.1} parent=47 // pred_fallthru
          _
        // Predicated region
        $region57: #{eeg_to_latent_mlp.1} parent=47 // pred_check
          %p964 = pneg %p208
        $region58: #{eeg_to_latent_mlp.1} parent=47 // pred_check_branch
          %966 = sbr.rel (%p964) target = $region60
        $region59: #{eeg_to_latent_mlp.1} parent=47 // pred_region
          %s968 = ssub.s32 256, 256
          %969 = vsyncadd [#allocation4], %s968
          %s970 = smul.addr %s23, 2
          %s971 = smul.addr %s970, 128
          %s972 = scalar_lea.hbm %s7, %s971
          %s974 = sshll.u32 [#allocation3], 4
          %s975 = int_to_ptr.vmem [resolvable:$true] %s974
          %977 = dma.vmem_to_hbm [thread:$0]  %s975, 256, %s972, [#allocation4]
        $region60: #{eeg_to_latent_mlp.1} parent=47 // pred_fallthru
          _
        // Predicated region
        $region61: #{eeg_to_latent_mlp.1} parent=47 // pred_check
          %p978 = pneg %p208
        $region62: #{eeg_to_latent_mlp.1} parent=47 // pred_check_branch
          %980 = sbr.rel (%p978) target = $region64
        $region63: #{eeg_to_latent_mlp.1} parent=47 // pred_region
          %981 = dma.done [#allocation4], 256
        $region64: #{eeg_to_latent_mlp.1} parent=47 // pred_fallthru
          _
      $region48: #{eeg_to_latent_mlp.1} parent=5 // pred_fallthru
        _
      %p982 = scmp.le.s32.totalorder 2, %s14
      // Predicated region
      $region65: #{eeg_to_latent_mlp.1} parent=5 // pred_check
        %p983 = pneg %p982
      $region66: #{eeg_to_latent_mlp.1} parent=5 // pred_check_branch
        %985 = sbr.rel (%p983) target = $region68
      $region67: #{eeg_to_latent_mlp.1} parent=5 // pred_region
        %s986 = ssub.s32 %s14, 2
      $region68: #{eeg_to_latent_mlp.1} parent=5 // pred_fallthru
        _
    $region6: #{eeg_to_latent_mlp.1} parent=1 // loop_footer
      %s18 = sadd.s32 1, %s14
    $region7: #{eeg_to_latent_mlp.1} parent=1 // loop_footer_branch
      %13 = sbr.rel target = $region3
    $region8: #{eeg_to_latent_mlp.1} parent=1 // loop_exit
      _
    %987 = vsyncpa [#allocation4], 1
    %s988 = scalar_lea.sflag [#allocation4], 1
    %989 = vsyncpa %s988, 1

</llo_original>
